<compile_context>
chip_gen: v7x
topology: tpu7x:2x2x1
jax: 0.10.0
libtpu: 0.0.40
codegen_flags: <defaults>
</compile_context>

<pallas_src>
import jax
import jax.numpy as jnp
from jax.experimental import pallas as pl
from jax.experimental.pallas import tpu as pltpu


def _round_up(x, m):
    return ((x + m - 1) // m) * m


def _oalayer_kernel(x_ref, w1_ref, b1_ref, w2_ref, b2_ref, out_ref):
    # x_ref: (TB, HW, C) f32, channels on the lane axis.
    # AdaptiveAvgPool2d(1): sum over spatial positions (the 1/(H*W) factor is
    # pre-folded into w1 by the wrapper, so no extra multiply here).
    pooled = jnp.sum(x_ref[...], axis=1)                               # (TB, C)
    # fc1 + ReLU (hidden dim padded to a full 128-lane tile -> full MXU cols)
    h = jnp.dot(pooled, w1_ref[...],
                preferred_element_type=jnp.float32) + b1_ref[...]
    h = jnp.maximum(h, 0.0)                                            # (TB, Hp)
    # fc2 (output dim padded to a full 128-lane tile -> unmasked stores)
    out_ref[...] = jnp.dot(h, w2_ref[...],
                           preferred_element_type=jnp.float32) + b2_ref[...]


def oalayer_forward(x, w1, b1, w2, b2, *, k, num_ops):
    """x: (B, C, H, W) f32.  w1: (C, 2*k*num_ops), b1: (2*k*num_ops,),
    w2: (2*k*num_ops, k*num_ops), b2: (k*num_ops,).  Returns (B, k, num_ops)."""
    B, C, H, W = x.shape
    HW = H * W
    hidden = w1.shape[1]
    out_feat = w2.shape[1]
    assert out_feat == k * num_ops

    # ---- layout: put channels on the lane axis ---------------------------
    x_flat = jnp.transpose(x, (0, 2, 3, 1)).reshape(B, HW, C)          # (B, HW, C)

    # ---- pad feature dims to full 128-lane tiles, fold mean into w1 ------
    Hp = _round_up(hidden, 128)
    Op = _round_up(out_feat, 128)
    w1_p = jnp.zeros((C, Hp), jnp.float32).at[:, :hidden].set(w1 / float(HW))
    b1_p = jnp.zeros((1, Hp), jnp.float32).at[:, :hidden].set(b1)
    w2_p = jnp.zeros((Hp, Op), jnp.float32).at[:hidden, :out_feat].set(w2)
    b2_p = jnp.zeros((1, Op), jnp.float32).at[:, :out_feat].set(b2)

    # ---- batch tile: multiple of 8; double-buffered activation block kept
    #      well under the smallest (v7x) scoped-VMEM budget -----------------
    row_bytes = HW * C * 4
    max_tb = max(8, ((16 * 1024 * 1024) // (2 * row_bytes)) // 8 * 8)
    TB = min(128, max_tb, _round_up(B, 8))
    B_pad = _round_up(B, TB)
    if B_pad != B:
        x_flat = jnp.pad(x_flat, ((0, B_pad - B), (0, 0), (0, 0)))
    # TODO(synk): for very large H*W, add a trailing "arbitrary" spatial grid
    # axis with a (TB, C) accumulator; spatial extent here is small enough for
    # a single block per batch tile.

    grid = (B_pad // TB,)
    out = pl.pallas_call(
        _oalayer_kernel,
        out_shape=jax.ShapeDtypeStruct((B_pad, Op), jnp.float32),
        grid=grid,
        in_specs=[
            pl.BlockSpec((TB, HW, C), lambda i: (i, 0, 0)),   # activations (batch-tiled)
            pl.BlockSpec((C, Hp), lambda i: (0, 0)),          # w1: resident across steps
            pl.BlockSpec((1, Hp), lambda i: (0, 0)),          # b1
            pl.BlockSpec((Hp, Op), lambda i: (0, 0)),         # w2
            pl.BlockSpec((1, Op), lambda i: (0, 0)),          # b2
        ],
        out_specs=pl.BlockSpec((TB, Op), lambda i: (i, 0)),
        compiler_params=pltpu.CompilerParams(
            dimension_semantics=("parallel",),
            vmem_limit_bytes=32 * 1024 * 1024,
        ),
    )(x_flat, w1_p, b1_p, w2_p, b2_p)

    return out[:B, :out_feat].reshape(-1, k, num_ops)


def init_params(key, channel, num_ops, k):
    """Deterministic synthetic parameters matching OALayer.__init__ shapes."""
    hidden = 2 * k * num_ops
    output = k * num_ops
    k1, k2, k3, k4 = jax.random.split(key, 4)
    # stored pre-transposed: (in_features, out_features)
    w1 = jax.random.normal(k1, (channel, hidden), jnp.float32) * 0.05
    b1 = jax.random.normal(k2, (hidden,), jnp.float32) * 0.05
    w2 = jax.random.normal(k3, (hidden, output), jnp.float32) * 0.05
    b2 = jax.random.normal(k4, (output,), jnp.float32) * 0.05
    return w1, b1, w2, b2


def reference_forward(x, w1, b1, w2, b2, *, k, num_ops):
    """Pure-JAX reference of the PyTorch forward."""
    pooled = jnp.mean(x, axis=(2, 3))            # (B, C)
    h = jnp.maximum(pooled @ w1 + b1, 0.0)
    y = h @ w2 + b2
    return y.reshape(-1, k, num_ops)


if __name__ == "__main__":
    # Module defaults: num_ops=34, channel=160, k=1.  Small spatial dims.
    num_ops, channel, k = 34, 160, 1
    B, H, W = 2, 8, 8

    key = jax.random.PRNGKey(0)
    kx, kp = jax.random.split(key)
    x = jax.random.normal(kx, (B, channel, H, W), jnp.float32)
    w1, b1, w2, b2 = init_params(kp, channel, num_ops, k)

    y = oalayer_forward(x, w1, b1, w2, b2, k=k, num_ops=num_ops)
    y = jax.block_until_ready(y)

    y_ref = reference_forward(x, w1, b1, w2, b2, k=k, num_ops=num_ops)
    assert y.shape == (B, k, num_ops), y.shape
    assert jnp.allclose(y, y_ref, atol=1e-4, rtol=1e-4), "mismatch vs reference"

    print("KERNEL_OK")
</pallas_src>

<mosaic_0001>
module attributes {stable_mosaic.version = 11 : i64} {
  func.func @_oalayer_kernel(%arg0: i32, %arg1: memref<8x64x160xf32, #tpu.memory_space<vmem>>, %arg2: memref<160x128xf32, #tpu.memory_space<vmem>>, %arg3: memref<1x128xf32, #tpu.memory_space<vmem>>, %arg4: memref<128x128xf32, #tpu.memory_space<vmem>>, %arg5: memref<1x128xf32, #tpu.memory_space<vmem>>, %arg6: memref<8x128xf32, #tpu.memory_space<vmem>>) attributes {dimension_semantics = [#tpu.dimension_semantics<parallel>], iteration_bounds = array<i64: 1>, scalar_prefetch = 0 : i64, scratch_operands = 0 : i64, tpu.core_type = #tpu.core_type<tc>, window_params = [{transform_indices = @transform_0, window_bounds = array<i64: 8, 64, 160>}, {pipeline_mode = #tpu.pipeline_mode<synchronous>, transform_indices = @transform_1, window_bounds = array<i64: 160, 128>}, {pipeline_mode = #tpu.pipeline_mode<synchronous>, transform_indices = @transform_2, window_bounds = array<i64: 1, 128>}, {pipeline_mode = #tpu.pipeline_mode<synchronous>, transform_indices = @transform_3, window_bounds = array<i64: 128, 128>}, {pipeline_mode = #tpu.pipeline_mode<synchronous>, transform_indices = @transform_4, window_bounds = array<i64: 1, 128>}, {transform_indices = @transform_5, window_bounds = array<i64: 8, 128>}]} {
    %c0 = arith.constant 0 : index
    %c0_0 = arith.constant 0 : index
    %c0_1 = arith.constant 0 : index
    %0 = vector.load %arg1[%c0, %c0_0, %c0_1] : memref<8x64x160xf32, #tpu.memory_space<vmem>>, vector<8x64x160xf32>
    %cst = arith.constant dense<0.000000e+00> : vector<8x160xf32>
    %1 = vector.multi_reduction <add>, %0, %cst [1] : vector<8x64x160xf32> to vector<8x160xf32>
    %c0_2 = arith.constant 0 : index
    %c0_3 = arith.constant 0 : index
    %2 = vector.load %arg2[%c0_2, %c0_3] : memref<160x128xf32, #tpu.memory_space<vmem>>, vector<160x128xf32>
    %cst_4 = arith.constant dense<0.000000e+00> : vector<8x128xf32>
    %3 = tpu.matmul %1, %2, %cst_4 {dimension_numbers = #tpu.dot_dimension_numbers<[1], [0], [0], [1], [0, 0, 1, 1], [], []>} : vector<8x160xf32>, vector<160x128xf32>, vector<8x128xf32> -> vector<8x128xf32>
    %c0_5 = arith.constant 0 : index
    %c0_6 = arith.constant 0 : index
    %4 = vector.load %arg3[%c0_5, %c0_6] : memref<1x128xf32, #tpu.memory_space<vmem>>, vector<1x128xf32>
    %5 = vector.broadcast %4 : vector<1x128xf32> to vector<8x128xf32>
    %6 = arith.addf %3, %5 : vector<8x128xf32>
    %cst_7 = arith.constant 0.000000e+00 : f32
    %7 = vector.broadcast %cst_7 : f32 to vector<8x128xf32>
    %8 = arith.maximumf %6, %7 : vector<8x128xf32>
    %c0_8 = arith.constant 0 : index
    %c0_9 = arith.constant 0 : index
    %9 = vector.load %arg4[%c0_8, %c0_9] : memref<128x128xf32, #tpu.memory_space<vmem>>, vector<128x128xf32>
    %cst_10 = arith.constant dense<0.000000e+00> : vector<8x128xf32>
    %10 = tpu.matmul %8, %9, %cst_10 {dimension_numbers = #tpu.dot_dimension_numbers<[1], [0], [0], [1], [0, 0, 1, 1], [], []>} : vector<8x128xf32>, vector<128x128xf32>, vector<8x128xf32> -> vector<8x128xf32>
    %c0_11 = arith.constant 0 : index
    %c0_12 = arith.constant 0 : index
    %11 = vector.load %arg5[%c0_11, %c0_12] : memref<1x128xf32, #tpu.memory_space<vmem>>, vector<1x128xf32>
    %12 = vector.broadcast %11 : vector<1x128xf32> to vector<8x128xf32>
    %13 = arith.addf %10, %12 : vector<8x128xf32>
    %c0_13 = arith.constant 0 : index
    %c0_14 = arith.constant 0 : index
    %14 = vector.load %arg6[%c0_13, %c0_14] : memref<8x128xf32, #tpu.memory_space<vmem>>, vector<8x128xf32>
    tpu.vector_store %arg6[%c0_13, %c0_14], %13 {strides = array<i32>} : memref<8x128xf32, #tpu.memory_space<vmem>>, vector<8x128xf32>,
    return
  }
  func.func @transform_0(%arg0: i32) -> (i32, i32, i32) {
    %c0_i32 = arith.constant 0 : i32
    %c0_i32_0 = arith.constant 0 : i32
    %c0_i32_1 = arith.constant 0 : i32
    return %arg0, %c0_i32, %c0_i32_0 : i32, i32, i32
  }
  func.func @transform_1(%arg0: i32) -> (i32, i32) {
    %c0_i32 = arith.constant 0 : i32
    %c0_i32_0 = arith.constant 0 : i32
    %c0_i32_1 = arith.constant 0 : i32
    return %c0_i32, %c0_i32_0 : i32, i32
  }
  func.func @transform_2(%arg0: i32) -> (i32, i32) {
    %c0_i32 = arith.constant 0 : i32
    %c0_i32_0 = arith.constant 0 : i32
    %c0_i32_1 = arith.constant 0 : i32
    return %c0_i32, %c0_i32_0 : i32, i32
  }
  func.func @transform_3(%arg0: i32) -> (i32, i32) {
    %c0_i32 = arith.constant 0 : i32
    %c0_i32_0 = arith.constant 0 : i32
    %c0_i32_1 = arith.constant 0 : i32
    return %c0_i32, %c0_i32_0 : i32, i32
  }
  func.func @transform_4(%arg0: i32) -> (i32, i32) {
    %c0_i32 = arith.constant 0 : i32
    %c0_i32_0 = arith.constant 0 : i32
    %c0_i32_1 = arith.constant 0 : i32
    return %c0_i32, %c0_i32_0 : i32, i32
  }
  func.func @transform_5(%arg0: i32) -> (i32, i32) {
    %c0_i32 = arith.constant 0 : i32
    %c0_i32_0 = arith.constant 0 : i32
    return %arg0, %c0_i32 : i32, i32
  }
}

</mosaic_0001>

<llo_original>
// kernel: tpu_custom_call.1
$region0: #{tpu_custom_call.1}
  #allocation0 [shape = 'u32[]', space=smem, size = 0x4, offset = 0x4, fixed_abs, tag = 'smem constant byte address 0x4 - core index']
  #allocation1 [shape = 'u32[144,128]{1,0:T(1,128)}', space=vmem, size = 0x12000, scoped, tag = 'internal scratch']
  %s0 = inlined_call_operand.hbm [shape: f32[8,64,160], index: 0, kind: input, shape index: {}]
  %s1 = inlined_call_operand.hbm [shape: f32[160,128], index: 1, kind: input, shape index: {}]
  %s2 = inlined_call_operand.vmem [shape: f32[1,128], index: 2, kind: input, shape index: {}]
  %s3 = inlined_call_operand.hbm [shape: f32[128,128], index: 3, kind: input, shape index: {}]
  %s4 = inlined_call_operand.vmem [shape: f32[1,128], index: 4, kind: input, shape index: {}]
  %s5 = inlined_call_operand.hbm [shape: f32[8,128], index: 5, kind: output, shape index: {}]
  %s6 = sld [smem:[#allocation0]]
  $region42: #{tpu_custom_call.1} parent=0
    _
  %s8 = ssub.s32 1, %s6
  %s9 = scalar_select 0, %s8, %s6
  $region1: #{tpu_custom_call.1} parent=0
    #allocation2 [shape = 'u8[524288]{0}', space=vmem, size = 0x80000, scoped, tag = 'input window, operand 0, single buffered']
    #allocation3 [shape = 's32[1]{0}', space=sflag, size = 0x4, scoped, tag = 'scoped memory for tpu_custom_call.1']
    #allocation4 [shape = 's32[1]{0}', space=sflag, size = 0x4, scoped, tag = 'scoped memory for tpu_custom_call.1']
    #allocation5 [shape = 'u8[81920]{0}', space=vmem, size = 0x14000, scoped, tag = 'input window, operand 1, single buffered']
    #allocation6 [shape = 's32[1]{0}', space=sflag, size = 0x4, scoped, tag = 'scoped memory for tpu_custom_call.1']
    #allocation7 [shape = 'u8[65536]{0}', space=vmem, size = 0x10000, scoped, tag = 'input window, operand 3, single buffered']
    #allocation8 [shape = 'u8[4096]{0}', space=vmem, size = 0x1000, scoped, tag = 'output window, operand 0, single buffered']
    %10 = vsyncpa [#allocation3], 0
    %11 = vsyncpa [#allocation6], 0
    %12 = vsyncpa [#allocation4], 0
    // Predicated region
    $region2: #{tpu_custom_call.1} parent=1 // pred_check
      _
    $region3: #{tpu_custom_call.1} parent=1 // pred_check_branch
      %14 = sbr.rel (0) target = $region5
    $region4: #{tpu_custom_call.1} parent=1 // pred_region
      %s16 = ssub.s32 16384, 16384
      %17 = vsyncadd [#allocation3], %s16
      %s18 = sshll.u32 [#allocation2], 4
      %s19 = int_to_ptr.vmem [resolvable:$true] %s18
      %24 = dma.hbm_to_vmem [thread:$0]  %s0, 16384, %s19, [#allocation3], 256, 256, 16
    $region5: #{tpu_custom_call.1} parent=1 // pred_fallthru
      _
    // Predicated region
    $region6: #{tpu_custom_call.1} parent=1 // pred_check
      _
    $region7: #{tpu_custom_call.1} parent=1 // pred_check_branch
      %26 = sbr.rel (0) target = $region9
    $region8: #{tpu_custom_call.1} parent=1 // pred_region
      %s28 = ssub.s32 2560, 2560
      %29 = vsyncadd [#allocation6], %s28
      %s30 = sshll.u32 [#allocation5], 4
      %s31 = int_to_ptr.vmem [resolvable:$true] %s30
      %36 = dma.hbm_to_vmem [thread:$0]  %s1, 2560, %s31, [#allocation6], 128, 128, 8
    $region9: #{tpu_custom_call.1} parent=1 // pred_fallthru
      _
    // Predicated region
    $region10: #{tpu_custom_call.1} parent=1 // pred_check
      _
    $region11: #{tpu_custom_call.1} parent=1 // pred_check_branch
      %38 = sbr.rel (0) target = $region13
    $region12: #{tpu_custom_call.1} parent=1 // pred_region
      _
    $region13: #{tpu_custom_call.1} parent=1 // pred_fallthru
      _
    // Predicated region
    $region14: #{tpu_custom_call.1} parent=1 // pred_check
      _
    $region15: #{tpu_custom_call.1} parent=1 // pred_check_branch
      %40 = sbr.rel (0) target = $region17
    $region16: #{tpu_custom_call.1} parent=1 // pred_region
      %s42 = ssub.s32 2048, 2048
      %43 = vsyncadd [#allocation6], %s42
      %s44 = sshll.u32 [#allocation7], 4
      %s45 = int_to_ptr.vmem [resolvable:$true] %s44
      %50 = dma.hbm_to_vmem [thread:$0]  %s3, 2048, %s45, [#allocation6], 128, 128, 8
    $region17: #{tpu_custom_call.1} parent=1 // pred_fallthru
      _
    // Predicated region
    $region18: #{tpu_custom_call.1} parent=1 // pred_check
      _
    $region19: #{tpu_custom_call.1} parent=1 // pred_check_branch
      %52 = sbr.rel (0) target = $region21
    $region20: #{tpu_custom_call.1} parent=1 // pred_region
      _
    $region21: #{tpu_custom_call.1} parent=1 // pred_fallthru
      _
    // Predicated region
    $region22: #{tpu_custom_call.1} parent=1 // pred_check
      _
    $region23: #{tpu_custom_call.1} parent=1 // pred_check_branch
      %54 = sbr.rel (0) target = $region25
    $region24: #{tpu_custom_call.1} parent=1 // pred_region
      %55 = dma.done [#allocation3], 16384
    $region25: #{tpu_custom_call.1} parent=1 // pred_fallthru
      _
    // Predicated region
    $region26: #{tpu_custom_call.1} parent=1 // pred_check
      _
    $region27: #{tpu_custom_call.1} parent=1 // pred_check_branch
      %57 = sbr.rel (0) target = $region29
    $region28: #{tpu_custom_call.1} parent=1 // pred_region
      %58 = dma.done [#allocation6], 2560
    $region29: #{tpu_custom_call.1} parent=1 // pred_fallthru
      _
    // Predicated region
    $region30: #{tpu_custom_call.1} parent=1 // pred_check
      _
    $region31: #{tpu_custom_call.1} parent=1 // pred_check_branch
      %60 = sbr.rel (0) target = $region33
    $region32: #{tpu_custom_call.1} parent=1 // pred_region
      %61 = dma.done [#allocation6], 2048
    $region33: #{tpu_custom_call.1} parent=1 // pred_fallthru
      _
    %v62 = vld [vmem:[#allocation2] sm:$0xff]
    %v63 = vld [vmem:[#allocation2 + $0x8] sm:$0xff]
    %v64 = vld [vmem:[#allocation2 + $0x10] sm:$0xff]
    %v65 = vld [vmem:[#allocation2 + $0x18] sm:$0xff]
    %v66 = vld [vmem:[#allocation2 + $0x20] sm:$0xff]
    %v67 = vld [vmem:[#allocation2 + $0x28] sm:$0xff]
    %v68 = vld [vmem:[#allocation2 + $0x30] sm:$0xff]
    %v69 = vld [vmem:[#allocation2 + $0x38] sm:$0xff]
    %v70 = vld [vmem:[#allocation2 + $0x40] sm:$0xff]
    %v71 = vld [vmem:[#allocation2 + $0x48] sm:$0xff]
    %v72 = vld [vmem:[#allocation2 + $0x50] sm:$0xff]
    %v73 = vld [vmem:[#allocation2 + $0x58] sm:$0xff]
    %v74 = vld [vmem:[#allocation2 + $0x60] sm:$0xff]
    %v75 = vld [vmem:[#allocation2 + $0x68] sm:$0xff]
    %v76 = vld [vmem:[#allocation2 + $0x70] sm:$0xff]
    %v77 = vld [vmem:[#allocation2 + $0x78] sm:$0xff]
    %v78 = vld [vmem:[#allocation2 + $0x80] sm:$0xff]
    %v79 = vld [vmem:[#allocation2 + $0x88] sm:$0xff]
    %v80 = vld [vmem:[#allocation2 + $0x90] sm:$0xff]
    %v81 = vld [vmem:[#allocation2 + $0x98] sm:$0xff]
    %v82 = vld [vmem:[#allocation2 + $0xa0] sm:$0xff]
    %v83 = vld [vmem:[#allocation2 + $0xa8] sm:$0xff]
    %v84 = vld [vmem:[#allocation2 + $0xb0] sm:$0xff]
    %v85 = vld [vmem:[#allocation2 + $0xb8] sm:$0xff]
    %v86 = vld [vmem:[#allocation2 + $0xc0] sm:$0xff]
    %v87 = vld [vmem:[#allocation2 + $0xc8] sm:$0xff]
    %v88 = vld [vmem:[#allocation2 + $0xd0] sm:$0xff]
    %v89 = vld [vmem:[#allocation2 + $0xd8] sm:$0xff]
    %v90 = vld [vmem:[#allocation2 + $0xe0] sm:$0xff]
    %v91 = vld [vmem:[#allocation2 + $0xe8] sm:$0xff]
    %v92 = vld [vmem:[#allocation2 + $0xf0] sm:$0xff]
    %v93 = vld [vmem:[#allocation2 + $0xf8] sm:$0xff]
    %v94 = vld [vmem:[#allocation2 + $0x100] sm:$0xff]
    %v95 = vld [vmem:[#allocation2 + $0x108] sm:$0xff]
    %v96 = vld [vmem:[#allocation2 + $0x110] sm:$0xff]
    %v97 = vld [vmem:[#allocation2 + $0x118] sm:$0xff]
    %v98 = vld [vmem:[#allocation2 + $0x120] sm:$0xff]
    %v99 = vld [vmem:[#allocation2 + $0x128] sm:$0xff]
    %v100 = vld [vmem:[#allocation2 + $0x130] sm:$0xff]
    %v101 = vld [vmem:[#allocation2 + $0x138] sm:$0xff]
    %v102 = vld [vmem:[#allocation2 + $0x140] sm:$0xff]
    %v103 = vld [vmem:[#allocation2 + $0x148] sm:$0xff]
    %v104 = vld [vmem:[#allocation2 + $0x150] sm:$0xff]
    %v105 = vld [vmem:[#allocation2 + $0x158] sm:$0xff]
    %v106 = vld [vmem:[#allocation2 + $0x160] sm:$0xff]
    %v107 = vld [vmem:[#allocation2 + $0x168] sm:$0xff]
    %v108 = vld [vmem:[#allocation2 + $0x170] sm:$0xff]
    %v109 = vld [vmem:[#allocation2 + $0x178] sm:$0xff]
    %v110 = vld [vmem:[#allocation2 + $0x180] sm:$0xff]
    %v111 = vld [vmem:[#allocation2 + $0x188] sm:$0xff]
    %v112 = vld [vmem:[#allocation2 + $0x190] sm:$0xff]
    %v113 = vld [vmem:[#allocation2 + $0x198] sm:$0xff]
    %v114 = vld [vmem:[#allocation2 + $0x1a0] sm:$0xff]
    %v115 = vld [vmem:[#allocation2 + $0x1a8] sm:$0xff]
    %v116 = vld [vmem:[#allocation2 + $0x1b0] sm:$0xff]
    %v117 = vld [vmem:[#allocation2 + $0x1b8] sm:$0xff]
    %v118 = vld [vmem:[#allocation2 + $0x1c0] sm:$0xff]
    %v119 = vld [vmem:[#allocation2 + $0x1c8] sm:$0xff]
    %v120 = vld [vmem:[#allocation2 + $0x1d0] sm:$0xff]
    %v121 = vld [vmem:[#allocation2 + $0x1d8] sm:$0xff]
    %v122 = vld [vmem:[#allocation2 + $0x1e0] sm:$0xff]
    %v123 = vld [vmem:[#allocation2 + $0x1e8] sm:$0xff]
    %v124 = vld [vmem:[#allocation2 + $0x1f0] sm:$0xff]
    %v125 = vld [vmem:[#allocation2 + $0x1f8] sm:$0xff]
    %v126 = vld [vmem:[#allocation2 + $0x200] sm:$0xff]
    %v127 = vld [vmem:[#allocation2 + $0x208] sm:$0xff]
    %v128 = vld [vmem:[#allocation2 + $0x210] sm:$0xff]
    %v129 = vld [vmem:[#allocation2 + $0x218] sm:$0xff]
    %v130 = vld [vmem:[#allocation2 + $0x220] sm:$0xff]
    %v131 = vld [vmem:[#allocation2 + $0x228] sm:$0xff]
    %v132 = vld [vmem:[#allocation2 + $0x230] sm:$0xff]
    %v133 = vld [vmem:[#allocation2 + $0x238] sm:$0xff]
    %v134 = vld [vmem:[#allocation2 + $0x240] sm:$0xff]
    %v135 = vld [vmem:[#allocation2 + $0x248] sm:$0xff]
    %v136 = vld [vmem:[#allocation2 + $0x250] sm:$0xff]
    %v137 = vld [vmem:[#allocation2 + $0x258] sm:$0xff]
    %v138 = vld [vmem:[#allocation2 + $0x260] sm:$0xff]
    %v139 = vld [vmem:[#allocation2 + $0x268] sm:$0xff]
    %v140 = vld [vmem:[#allocation2 + $0x270] sm:$0xff]
    %v141 = vld [vmem:[#allocation2 + $0x278] sm:$0xff]
    %v142 = vld [vmem:[#allocation2 + $0x280] sm:$0xff]
    %v143 = vld [vmem:[#allocation2 + $0x288] sm:$0xff]
    %v144 = vld [vmem:[#allocation2 + $0x290] sm:$0xff]
    %v145 = vld [vmem:[#allocation2 + $0x298] sm:$0xff]
    %v146 = vld [vmem:[#allocation2 + $0x2a0] sm:$0xff]
    %v147 = vld [vmem:[#allocation2 + $0x2a8] sm:$0xff]
    %v148 = vld [vmem:[#allocation2 + $0x2b0] sm:$0xff]
    %v149 = vld [vmem:[#allocation2 + $0x2b8] sm:$0xff]
    %v150 = vld [vmem:[#allocation2 + $0x2c0] sm:$0xff]
    %v151 = vld [vmem:[#allocation2 + $0x2c8] sm:$0xff]
    %v152 = vld [vmem:[#allocation2 + $0x2d0] sm:$0xff]
    %v153 = vld [vmem:[#allocation2 + $0x2d8] sm:$0xff]
    %v154 = vld [vmem:[#allocation2 + $0x2e0] sm:$0xff]
    %v155 = vld [vmem:[#allocation2 + $0x2e8] sm:$0xff]
    %v156 = vld [vmem:[#allocation2 + $0x2f0] sm:$0xff]
    %v157 = vld [vmem:[#allocation2 + $0x2f8] sm:$0xff]
    %v158 = vld [vmem:[#allocation2 + $0x300] sm:$0xff]
    %v159 = vld [vmem:[#allocation2 + $0x308] sm:$0xff]
    %v160 = vld [vmem:[#allocation2 + $0x310] sm:$0xff]
    %v161 = vld [vmem:[#allocation2 + $0x318] sm:$0xff]
    %v162 = vld [vmem:[#allocation2 + $0x320] sm:$0xff]
    %v163 = vld [vmem:[#allocation2 + $0x328] sm:$0xff]
    %v164 = vld [vmem:[#allocation2 + $0x330] sm:$0xff]
    %v165 = vld [vmem:[#allocation2 + $0x338] sm:$0xff]
    %v166 = vld [vmem:[#allocation2 + $0x340] sm:$0xff]
    %v167 = vld [vmem:[#allocation2 + $0x348] sm:$0xff]
    %v168 = vld [vmem:[#allocation2 + $0x350] sm:$0xff]
    %v169 = vld [vmem:[#allocation2 + $0x358] sm:$0xff]
    %v170 = vld [vmem:[#allocation2 + $0x360] sm:$0xff]
    %v171 = vld [vmem:[#allocation2 + $0x368] sm:$0xff]
    %v172 = vld [vmem:[#allocation2 + $0x370] sm:$0xff]
    %v173 = vld [vmem:[#allocation2 + $0x378] sm:$0xff]
    %v174 = vld [vmem:[#allocation2 + $0x380] sm:$0xff]
    %v175 = vld [vmem:[#allocation2 + $0x388] sm:$0xff]
    %v176 = vld [vmem:[#allocation2 + $0x390] sm:$0xff]
    %v177 = vld [vmem:[#allocation2 + $0x398] sm:$0xff]
    %v178 = vld [vmem:[#allocation2 + $0x3a0] sm:$0xff]
    %v179 = vld [vmem:[#allocation2 + $0x3a8] sm:$0xff]
    %v180 = vld [vmem:[#allocation2 + $0x3b0] sm:$0xff]
    %v181 = vld [vmem:[#allocation2 + $0x3b8] sm:$0xff]
    %v182 = vld [vmem:[#allocation2 + $0x3c0] sm:$0xff]
    %v183 = vld [vmem:[#allocation2 + $0x3c8] sm:$0xff]
    %v184 = vld [vmem:[#allocation2 + $0x3d0] sm:$0xff]
    %v185 = vld [vmem:[#allocation2 + $0x3d8] sm:$0xff]
    %v186 = vld [vmem:[#allocation2 + $0x3e0] sm:$0xff]
    %v187 = vld [vmem:[#allocation2 + $0x3e8] sm:$0xff]
    %v188 = vld [vmem:[#allocation2 + $0x3f0] sm:$0xff]
    %v189 = vld [vmem:[#allocation2 + $0x3f8] sm:$0xff]
    %v190 = vadd.f32 %v62, %v64
    %v191 = vadd.f32 %v190, %v66
    %v192 = vadd.f32 %v191, %v68
    %v193 = vadd.f32 %v192, %v70
    %v194 = vadd.f32 %v193, %v72
    %v195 = vadd.f32 %v194, %v74
    %v196 = vadd.f32 %v195, %v76
    %v197 = vrot.slane %v196, 4
    %v198 = vadd.f32 %v196, %v197
    %v199 = vrot.slane %v198, 2
    %v200 = vadd.f32 %v198, %v199
    %v201 = vrot.slane %v200, 1
    %v202 = vadd.f32 %v200, %v201
    %vm203 = vcmask 261120
    %v204 = vsel %vm203, %v63, 0.0
    %v205 = vsel %vm203, %v65, 0.0
    %v206 = vadd.f32 %v204, %v205
    %v207 = vsel %vm203, %v67, 0.0
    %v208 = vadd.f32 %v206, %v207
    %v209 = vsel %vm203, %v69, 0.0
    %v210 = vadd.f32 %v208, %v209
    %v211 = vsel %vm203, %v71, 0.0
    %v212 = vadd.f32 %v210, %v211
    %v213 = vsel %vm203, %v73, 0.0
    %v214 = vadd.f32 %v212, %v213
    %v215 = vsel %vm203, %v75, 0.0
    %v216 = vadd.f32 %v214, %v215
    %v217 = vsel %vm203, %v77, 0.0
    %v218 = vadd.f32 %v216, %v217
    %v219 = vrot.slane %v218, 4
    %v220 = vadd.f32 %v218, %v219
    %v221 = vrot.slane %v220, 2
    %v222 = vadd.f32 %v220, %v221
    %v223 = vrot.slane %v222, 1
    %v224 = vadd.f32 %v222, %v223
    %v225 = vadd.f32 %v78, %v80
    %v226 = vadd.f32 %v225, %v82
    %v227 = vadd.f32 %v226, %v84
    %v228 = vadd.f32 %v227, %v86
    %v229 = vadd.f32 %v228, %v88
    %v230 = vadd.f32 %v229, %v90
    %v231 = vadd.f32 %v230, %v92
    %v232 = vrot.slane %v231, 4
    %v233 = vadd.f32 %v231, %v232
    %v234 = vrot.slane %v233, 2
    %v235 = vadd.f32 %v233, %v234
    %v236 = vrot.slane %v235, 1
    %v237 = vadd.f32 %v235, %v236
    %v238 = vsel %vm203, %v79, 0.0
    %v239 = vsel %vm203, %v81, 0.0
    %v240 = vadd.f32 %v238, %v239
    %v241 = vsel %vm203, %v83, 0.0
    %v242 = vadd.f32 %v240, %v241
    %v243 = vsel %vm203, %v85, 0.0
    %v244 = vadd.f32 %v242, %v243
    %v245 = vsel %vm203, %v87, 0.0
    %v246 = vadd.f32 %v244, %v245
    %v247 = vsel %vm203, %v89, 0.0
    %v248 = vadd.f32 %v246, %v247
    %v249 = vsel %vm203, %v91, 0.0
    %v250 = vadd.f32 %v248, %v249
    %v251 = vsel %vm203, %v93, 0.0
    %v252 = vadd.f32 %v250, %v251
    %v253 = vrot.slane %v252, 4
    %v254 = vadd.f32 %v252, %v253
    %v255 = vrot.slane %v254, 2
    %v256 = vadd.f32 %v254, %v255
    %v257 = vrot.slane %v256, 1
    %v258 = vadd.f32 %v256, %v257
    %v259 = vadd.f32 %v94, %v96
    %v260 = vadd.f32 %v259, %v98
    %v261 = vadd.f32 %v260, %v100
    %v262 = vadd.f32 %v261, %v102
    %v263 = vadd.f32 %v262, %v104
    %v264 = vadd.f32 %v263, %v106
    %v265 = vadd.f32 %v264, %v108
    %v266 = vrot.slane %v265, 4
    %v267 = vadd.f32 %v265, %v266
    %v268 = vrot.slane %v267, 2
    %v269 = vadd.f32 %v267, %v268
    %v270 = vrot.slane %v269, 1
    %v271 = vadd.f32 %v269, %v270
    %v272 = vsel %vm203, %v95, 0.0
    %v273 = vsel %vm203, %v97, 0.0
    %v274 = vadd.f32 %v272, %v273
    %v275 = vsel %vm203, %v99, 0.0
    %v276 = vadd.f32 %v274, %v275
    %v277 = vsel %vm203, %v101, 0.0
    %v278 = vadd.f32 %v276, %v277
    %v279 = vsel %vm203, %v103, 0.0
    %v280 = vadd.f32 %v278, %v279
    %v281 = vsel %vm203, %v105, 0.0
    %v282 = vadd.f32 %v280, %v281
    %v283 = vsel %vm203, %v107, 0.0
    %v284 = vadd.f32 %v282, %v283
    %v285 = vsel %vm203, %v109, 0.0
    %v286 = vadd.f32 %v284, %v285
    %v287 = vrot.slane %v286, 4
    %v288 = vadd.f32 %v286, %v287
    %v289 = vrot.slane %v288, 2
    %v290 = vadd.f32 %v288, %v289
    %v291 = vrot.slane %v290, 1
    %v292 = vadd.f32 %v290, %v291
    %v293 = vadd.f32 %v110, %v112
    %v294 = vadd.f32 %v293, %v114
    %v295 = vadd.f32 %v294, %v116
    %v296 = vadd.f32 %v295, %v118
    %v297 = vadd.f32 %v296, %v120
    %v298 = vadd.f32 %v297, %v122
    %v299 = vadd.f32 %v298, %v124
    %v300 = vrot.slane %v299, 4
    %v301 = vadd.f32 %v299, %v300
    %v302 = vrot.slane %v301, 2
    %v303 = vadd.f32 %v301, %v302
    %v304 = vrot.slane %v303, 1
    %v305 = vadd.f32 %v303, %v304
    %v306 = vsel %vm203, %v111, 0.0
    %v307 = vsel %vm203, %v113, 0.0
    %v308 = vadd.f32 %v306, %v307
    %v309 = vsel %vm203, %v115, 0.0
    %v310 = vadd.f32 %v308, %v309
    %v311 = vsel %vm203, %v117, 0.0
    %v312 = vadd.f32 %v310, %v311
    %v313 = vsel %vm203, %v119, 0.0
    %v314 = vadd.f32 %v312, %v313
    %v315 = vsel %vm203, %v121, 0.0
    %v316 = vadd.f32 %v314, %v315
    %v317 = vsel %vm203, %v123, 0.0
    %v318 = vadd.f32 %v316, %v317
    %v319 = vsel %vm203, %v125, 0.0
    %v320 = vadd.f32 %v318, %v319
    %v321 = vrot.slane %v320, 4
    %v322 = vadd.f32 %v320, %v321
    %v323 = vrot.slane %v322, 2
    %v324 = vadd.f32 %v322, %v323
    %v325 = vrot.slane %v324, 1
    %v326 = vadd.f32 %v324, %v325
    %v327 = vadd.f32 %v126, %v128
    %v328 = vadd.f32 %v327, %v130
    %v329 = vadd.f32 %v328, %v132
    %v330 = vadd.f32 %v329, %v134
    %v331 = vadd.f32 %v330, %v136
    %v332 = vadd.f32 %v331, %v138
    %v333 = vadd.f32 %v332, %v140
    %v334 = vrot.slane %v333, 4
    %v335 = vadd.f32 %v333, %v334
    %v336 = vrot.slane %v335, 2
    %v337 = vadd.f32 %v335, %v336
    %v338 = vrot.slane %v337, 1
    %v339 = vadd.f32 %v337, %v338
    %v340 = vsel %vm203, %v127, 0.0
    %v341 = vsel %vm203, %v129, 0.0
    %v342 = vadd.f32 %v340, %v341
    %v343 = vsel %vm203, %v131, 0.0
    %v344 = vadd.f32 %v342, %v343
    %v345 = vsel %vm203, %v133, 0.0
    %v346 = vadd.f32 %v344, %v345
    %v347 = vsel %vm203, %v135, 0.0
    %v348 = vadd.f32 %v346, %v347
    %v349 = vsel %vm203, %v137, 0.0
    %v350 = vadd.f32 %v348, %v349
    %v351 = vsel %vm203, %v139, 0.0
    %v352 = vadd.f32 %v350, %v351
    %v353 = vsel %vm203, %v141, 0.0
    %v354 = vadd.f32 %v352, %v353
    %v355 = vrot.slane %v354, 4
    %v356 = vadd.f32 %v354, %v355
    %v357 = vrot.slane %v356, 2
    %v358 = vadd.f32 %v356, %v357
    %v359 = vrot.slane %v358, 1
    %v360 = vadd.f32 %v358, %v359
    %v361 = vadd.f32 %v142, %v144
    %v362 = vadd.f32 %v361, %v146
    %v363 = vadd.f32 %v362, %v148
    %v364 = vadd.f32 %v363, %v150
    %v365 = vadd.f32 %v364, %v152
    %v366 = vadd.f32 %v365, %v154
    %v367 = vadd.f32 %v366, %v156
    %v368 = vrot.slane %v367, 4
    %v369 = vadd.f32 %v367, %v368
    %v370 = vrot.slane %v369, 2
    %v371 = vadd.f32 %v369, %v370
    %v372 = vrot.slane %v371, 1
    %v373 = vadd.f32 %v371, %v372
    %v374 = vsel %vm203, %v143, 0.0
    %v375 = vsel %vm203, %v145, 0.0
    %v376 = vadd.f32 %v374, %v375
    %v377 = vsel %vm203, %v147, 0.0
    %v378 = vadd.f32 %v376, %v377
    %v379 = vsel %vm203, %v149, 0.0
    %v380 = vadd.f32 %v378, %v379
    %v381 = vsel %vm203, %v151, 0.0
    %v382 = vadd.f32 %v380, %v381
    %v383 = vsel %vm203, %v153, 0.0
    %v384 = vadd.f32 %v382, %v383
    %v385 = vsel %vm203, %v155, 0.0
    %v386 = vadd.f32 %v384, %v385
    %v387 = vsel %vm203, %v157, 0.0
    %v388 = vadd.f32 %v386, %v387
    %v389 = vrot.slane %v388, 4
    %v390 = vadd.f32 %v388, %v389
    %v391 = vrot.slane %v390, 2
    %v392 = vadd.f32 %v390, %v391
    %v393 = vrot.slane %v392, 1
    %v394 = vadd.f32 %v392, %v393
    %v395 = vadd.f32 %v158, %v160
    %v396 = vadd.f32 %v395, %v162
    %v397 = vadd.f32 %v396, %v164
    %v398 = vadd.f32 %v397, %v166
    %v399 = vadd.f32 %v398, %v168
    %v400 = vadd.f32 %v399, %v170
    %v401 = vadd.f32 %v400, %v172
    %v402 = vrot.slane %v401, 4
    %v403 = vadd.f32 %v401, %v402
    %v404 = vrot.slane %v403, 2
    %v405 = vadd.f32 %v403, %v404
    %v406 = vrot.slane %v405, 1
    %v407 = vadd.f32 %v405, %v406
    %v408 = vsel %vm203, %v159, 0.0
    %v409 = vsel %vm203, %v161, 0.0
    %v410 = vadd.f32 %v408, %v409
    %v411 = vsel %vm203, %v163, 0.0
    %v412 = vadd.f32 %v410, %v411
    %v413 = vsel %vm203, %v165, 0.0
    %v414 = vadd.f32 %v412, %v413
    %v415 = vsel %vm203, %v167, 0.0
    %v416 = vadd.f32 %v414, %v415
    %v417 = vsel %vm203, %v169, 0.0
    %v418 = vadd.f32 %v416, %v417
    %v419 = vsel %vm203, %v171, 0.0
    %v420 = vadd.f32 %v418, %v419
    %v421 = vsel %vm203, %v173, 0.0
    %v422 = vadd.f32 %v420, %v421
    %v423 = vrot.slane %v422, 4
    %v424 = vadd.f32 %v422, %v423
    %v425 = vrot.slane %v424, 2
    %v426 = vadd.f32 %v424, %v425
    %v427 = vrot.slane %v426, 1
    %v428 = vadd.f32 %v426, %v427
    %v429 = vadd.f32 %v174, %v176
    %v430 = vadd.f32 %v429, %v178
    %v431 = vadd.f32 %v430, %v180
    %v432 = vadd.f32 %v431, %v182
    %v433 = vadd.f32 %v432, %v184
    %v434 = vadd.f32 %v433, %v186
    %v435 = vadd.f32 %v434, %v188
    %v436 = vrot.slane %v435, 4
    %v437 = vadd.f32 %v435, %v436
    %v438 = vrot.slane %v437, 2
    %v439 = vadd.f32 %v437, %v438
    %v440 = vrot.slane %v439, 1
    %v441 = vadd.f32 %v439, %v440
    %v442 = vsel %vm203, %v175, 0.0
    %v443 = vsel %vm203, %v177, 0.0
    %v444 = vadd.f32 %v442, %v443
    %v445 = vsel %vm203, %v179, 0.0
    %v446 = vadd.f32 %v444, %v445
    %v447 = vsel %vm203, %v181, 0.0
    %v448 = vadd.f32 %v446, %v447
    %v449 = vsel %vm203, %v183, 0.0
    %v450 = vadd.f32 %v448, %v449
    %v451 = vsel %vm203, %v185, 0.0
    %v452 = vadd.f32 %v450, %v451
    %v453 = vsel %vm203, %v187, 0.0
    %v454 = vadd.f32 %v452, %v453
    %v455 = vsel %vm203, %v189, 0.0
    %v456 = vadd.f32 %v454, %v455
    %v457 = vrot.slane %v456, 4
    %v458 = vadd.f32 %v456, %v457
    %v459 = vrot.slane %v458, 2
    %v460 = vadd.f32 %v458, %v459
    %v461 = vrot.slane %v460, 1
    %v462 = vadd.f32 %v460, %v461
    %v463 = vld [vmem:[#allocation5] sm:$0xff]
    %v464 = vld [vmem:[#allocation5 + $0x8] sm:$0xff]
    %v465 = vld [vmem:[#allocation5 + $0x10] sm:$0xff]
    %v466 = vld [vmem:[#allocation5 + $0x18] sm:$0xff]
    %v467 = vld [vmem:[#allocation5 + $0x20] sm:$0xff]
    %v468 = vld [vmem:[#allocation5 + $0x28] sm:$0xff]
    %v469 = vld [vmem:[#allocation5 + $0x30] sm:$0xff]
    %v470 = vld [vmem:[#allocation5 + $0x38] sm:$0xff]
    %v471 = vld [vmem:[#allocation5 + $0x40] sm:$0xff]
    %v472 = vld [vmem:[#allocation5 + $0x48] sm:$0xff]
    %v473 = vld [vmem:[#allocation5 + $0x50] sm:$0xff]
    %v474 = vld [vmem:[#allocation5 + $0x58] sm:$0xff]
    %v475 = vld [vmem:[#allocation5 + $0x60] sm:$0xff]
    %v476 = vld [vmem:[#allocation5 + $0x68] sm:$0xff]
    %v477 = vld [vmem:[#allocation5 + $0x70] sm:$0xff]
    %v478 = vld [vmem:[#allocation5 + $0x78] sm:$0xff]
    %v479 = vld [vmem:[#allocation5 + $0x80] sm:$0xff]
    %v480 = vld [vmem:[#allocation5 + $0x88] sm:$0xff]
    %v481 = vld [vmem:[#allocation5 + $0x90] sm:$0xff]
    %v482 = vld [vmem:[#allocation5 + $0x98] sm:$0xff]
    %v483 = vld [vmem:[%s2] sm:$0x1]
    %v485 = vlaneseq
    %v486 = vshrl.u32 %v485, 7
    %v487 = vsub.s32 0, %v486
    %v488 = vrot.slane %v483, %v487
    %vm506 = vcmask 1041409
    %v507 = vsel %vm506, %v237, %v202
    %vm508 = vcmask 1042434
    %v509 = vsel %vm508, %v271, %v507
    %vm510 = vcmask 1043459
    %v511 = vsel %vm510, %v305, %v509
    %vm512 = vcmask 1044484
    %v513 = vsel %vm512, %v339, %v511
    %vm514 = vcmask 1045509
    %v515 = vsel %vm514, %v373, %v513
    %vm516 = vcmask 1046534
    %v517 = vsel %vm516, %v407, %v515
    %vm518 = vcmask 1047559
    %v519 = vsel %vm518, %v441, %v517
    %v520 = vsel %vm506, %v258, %v224
    %v521 = vsel %vm508, %v292, %v520
    %v522 = vsel %vm510, %v326, %v521
    %v523 = vsel %vm512, %v360, %v522
    %v524 = vsel %vm514, %v394, %v523
    %v525 = vsel %vm516, %v428, %v524
    %v526 = vsel %vm518, %v462, %v525
    %v528 = vsel %vm203, %v526, 0
    %530 = vmatprep.subr.mxu0 0.0
    %531 = vmatpush1.msra.mxu0 %v463
    %532 = vmatprep.subr.mxu0 0.0
    %533 = vmatpush1.msra.mxu0 %v464
    %534 = vmatprep.subr.mxu0 0.0
    %535 = vmatpush1.msra.mxu0 %v465
    %536 = vmatprep.subr.mxu0 0.0
    %537 = vmatpush1.msra.mxu0 %v466
    %538 = vmatprep.subr.mxu0 0.0
    %539 = vmatpush1.msra.mxu0 %v467
    %540 = vmatprep.subr.mxu0 0.0
    %541 = vmatpush1.msra.mxu0 %v468
    %542 = vmatprep.subr.mxu0 0.0
    %543 = vmatpush1.msra.mxu0 %v469
    %544 = vmatprep.subr.mxu0 0.0
    %545 = vmatpush1.msra.mxu0 %v470
    %546 = vmatprep.subr.mxu0 0.0
    %547 = vmatpush1.msra.mxu0 %v471
    %548 = vmatprep.subr.mxu0 0.0
    %549 = vmatpush1.msra.mxu0 %v472
    %550 = vmatprep.subr.mxu0 0.0
    %551 = vmatpush1.msra.mxu0 %v473
    %552 = vmatprep.subr.mxu0 0.0
    %553 = vmatpush1.msra.mxu0 %v474
    %554 = vmatprep.subr.mxu0 0.0
    %555 = vmatpush1.msra.mxu0 %v475
    %556 = vmatprep.subr.mxu0 0.0
    %557 = vmatpush1.msra.mxu0 %v476
    %558 = vmatprep.subr.mxu0 0.0
    %559 = vmatpush1.msra.mxu0 %v477
    %560 = vmatprep.subr.mxu0 0.0
    %561 = vmatpush1.msra.mxu0 %v478
    %562 = vmatprep.subr.mxu0 0.0
    %563 = vmatpush1.msra.mxu0 %v479
    %564 = vmatprep.subr.mxu0 0.0
    %565 = vmatpush1.msra.mxu0 %v480
    %566 = vmatprep.subr.mxu0 0.0
    %567 = vmatpush1.msra.mxu0 %v481
    %568 = vmatprep.subr.mxu0 0.0
    %569 = vmatpush1.msra.mxu0 %v482
    %570 = vmatprep.subr.mxu0 0.0
    %571 = vmatpush1.msra.mxu0 0.0
    %572 = vmatprep.subr.mxu0 0.0
    %573 = vmatpush1.msra.mxu0 0.0
    %574 = vmatprep.subr.mxu0 0.0
    %575 = vmatpush1.msra.mxu0 0.0
    %576 = vmatprep.subr.mxu0 0.0
    %577 = vmatpush1.msra.mxu0 0.0
    %578 = vmatprep.subr.mxu0 0.0
    %579 = vmatpush1.msra.mxu0 0.0
    %580 = vmatprep.subr.mxu0 0.0
    %581 = vmatpush1.msra.mxu0 0.0
    %582 = vmatprep.subr.mxu0 0.0
    %583 = vmatpush1.msra.mxu0 0.0
    %584 = vmatprep.subr.mxu0 0.0
    %585 = vmatpush1.msra.mxu0 0.0
    %586 = vmatprep.subr.mxu0 0.0
    %587 = vmatpush1.msra.mxu0 0.0
    %588 = vmatprep.subr.mxu0 0.0
    %589 = vmatpush1.msra.mxu0 0.0
    %590 = vmatprep.subr.mxu0 0.0
    %591 = vmatpush1.msra.mxu0 0.0
    %592 = vmatprep.subr.mxu0 0.0
    %593 = vmatpush1.msra.mxu0 0.0
    %594 = vmatprep.mubr.f32.mxu0 %v528
    %595 = vmatmul.mubr.f32.gmra.mrb[0].mxu0 %v519
    %v596 = vpop.f32.mrb[0].mxu0
    %v597 = vadd.f32 %v488, %v596
    %v598 = vpop.f32.mrb[0].mxu0
    %599 = vdwg.mxu0
    %v600 = vmax.f32 %v597, 0.0
    %v601 = vld [vmem:[#allocation7] sm:$0xff]
    %v602 = vld [vmem:[#allocation7 + $0x8] sm:$0xff]
    %v603 = vld [vmem:[#allocation7 + $0x10] sm:$0xff]
    %v604 = vld [vmem:[#allocation7 + $0x18] sm:$0xff]
    %v605 = vld [vmem:[#allocation7 + $0x20] sm:$0xff]
    %v606 = vld [vmem:[#allocation7 + $0x28] sm:$0xff]
    %v607 = vld [vmem:[#allocation7 + $0x30] sm:$0xff]
    %v608 = vld [vmem:[#allocation7 + $0x38] sm:$0xff]
    %v609 = vld [vmem:[#allocation7 + $0x40] sm:$0xff]
    %v610 = vld [vmem:[#allocation7 + $0x48] sm:$0xff]
    %v611 = vld [vmem:[#allocation7 + $0x50] sm:$0xff]
    %v612 = vld [vmem:[#allocation7 + $0x58] sm:$0xff]
    %v613 = vld [vmem:[#allocation7 + $0x60] sm:$0xff]
    %v614 = vld [vmem:[#allocation7 + $0x68] sm:$0xff]
    %v615 = vld [vmem:[#allocation7 + $0x70] sm:$0xff]
    %v616 = vld [vmem:[#allocation7 + $0x78] sm:$0xff]
    %v617 = vld [vmem:[%s4] sm:$0x1]
    %v619 = vlaneseq
    %v620 = vshrl.u32 %v619, 7
    %v621 = vsub.s32 0, %v620
    %v622 = vrot.slane %v617, %v621
    %624 = vmatprep.subr.mxu0 0.0
    %625 = vmatpush1.msra.mxu0 %v601
    %626 = vmatprep.subr.mxu0 0.0
    %627 = vmatpush1.msra.mxu0 %v602
    %628 = vmatprep.subr.mxu0 0.0
    %629 = vmatpush1.msra.mxu0 %v603
    %630 = vmatprep.subr.mxu0 0.0
    %631 = vmatpush1.msra.mxu0 %v604
    %632 = vmatprep.subr.mxu0 0.0
    %633 = vmatpush1.msra.mxu0 %v605
    %634 = vmatprep.subr.mxu0 0.0
    %635 = vmatpush1.msra.mxu0 %v606
    %636 = vmatprep.subr.mxu0 0.0
    %637 = vmatpush1.msra.mxu0 %v607
    %638 = vmatprep.subr.mxu0 0.0
    %639 = vmatpush1.msra.mxu0 %v608
    %640 = vmatprep.subr.mxu0 0.0
    %641 = vmatpush1.msra.mxu0 %v609
    %642 = vmatprep.subr.mxu0 0.0
    %643 = vmatpush1.msra.mxu0 %v610
    %644 = vmatprep.subr.mxu0 0.0
    %645 = vmatpush1.msra.mxu0 %v611
    %646 = vmatprep.subr.mxu0 0.0
    %647 = vmatpush1.msra.mxu0 %v612
    %648 = vmatprep.subr.mxu0 0.0
    %649 = vmatpush1.msra.mxu0 %v613
    %650 = vmatprep.subr.mxu0 0.0
    %651 = vmatpush1.msra.mxu0 %v614
    %652 = vmatprep.subr.mxu0 0.0
    %653 = vmatpush1.msra.mxu0 %v615
    %654 = vmatprep.subr.mxu0 0.0
    %655 = vmatpush1.msra.mxu0 %v616
    %656 = vmatprep.subr.mxu0 0.0
    %657 = vmatpush1.msra.mxu0 0.0
    %658 = vmatprep.subr.mxu0 0.0
    %659 = vmatpush1.msra.mxu0 0.0
    %660 = vmatprep.subr.mxu0 0.0
    %661 = vmatpush1.msra.mxu0 0.0
    %662 = vmatprep.subr.mxu0 0.0
    %663 = vmatpush1.msra.mxu0 0.0
    %664 = vmatprep.subr.mxu0 0.0
    %665 = vmatpush1.msra.mxu0 0.0
    %666 = vmatprep.subr.mxu0 0.0
    %667 = vmatpush1.msra.mxu0 0.0
    %668 = vmatprep.subr.mxu0 0.0
    %669 = vmatpush1.msra.mxu0 0.0
    %670 = vmatprep.subr.mxu0 0.0
    %671 = vmatpush1.msra.mxu0 0.0
    %672 = vmatprep.subr.mxu0 0.0
    %673 = vmatpush1.msra.mxu0 0.0
    %674 = vmatprep.subr.mxu0 0.0
    %675 = vmatpush1.msra.mxu0 0.0
    %676 = vmatprep.subr.mxu0 0.0
    %677 = vmatpush1.msra.mxu0 0.0
    %678 = vmatprep.subr.mxu0 0.0
    %679 = vmatpush1.msra.mxu0 0.0
    %680 = vmatprep.subr.mxu0 0.0
    %681 = vmatpush1.msra.mxu0 0.0
    %682 = vmatprep.subr.mxu0 0.0
    %683 = vmatpush1.msra.mxu0 0.0
    %684 = vmatprep.subr.mxu0 0.0
    %685 = vmatpush1.msra.mxu0 0.0
    %686 = vmatprep.subr.mxu0 0.0
    %687 = vmatpush1.msra.mxu0 0.0
    %688 = vmatprep.mubr.f32.mxu0 0.0
    %689 = vmatmul.mubr.f32.gmra.mrb[0].mxu0 %v600
    %v690 = vpop.f32.mrb[0].mxu0
    %v691 = vadd.f32 %v622, %v690
    %v692 = vpop.f32.mrb[0].mxu0
    %693 = vdwg.mxu0
    %694 = vst [vmem:[#allocation8] sm:$0xff] %v691
    // Predicated region
    $region34: #{tpu_custom_call.1} parent=1 // pred_check
      _
    $region35: #{tpu_custom_call.1} parent=1 // pred_check_branch
      %696 = sbr.rel (0) target = $region37
    $region36: #{tpu_custom_call.1} parent=1 // pred_region
      %s698 = ssub.s32 128, 128
      %699 = vsyncadd [#allocation4], %s698
      %s701 = sshll.u32 [#allocation8], 4
      %s702 = int_to_ptr.vmem [resolvable:$true] %s701
      %704 = dma.vmem_to_hbm [thread:$0]  %s702, 128, %s5, [#allocation4]
    $region37: #{tpu_custom_call.1} parent=1 // pred_fallthru
      _
    // Predicated region
    $region38: #{tpu_custom_call.1} parent=1 // pred_check
      _
    $region39: #{tpu_custom_call.1} parent=1 // pred_check_branch
      %706 = sbr.rel (0) target = $region41
    $region40: #{tpu_custom_call.1} parent=1 // pred_region
      %707 = dma.done [#allocation4], 128
    $region41: #{tpu_custom_call.1} parent=1 // pred_fallthru
      _
    %708 = vsyncpa [#allocation3], 1
    %709 = vsyncpa [#allocation6], 1
    %710 = vsyncpa [#allocation4], 1

</llo_original>
